<compile_context>
chip_gen: v7x
topology: tpu7x:2x2x1
jax: 0.10.0
libtpu: 0.0.40
codegen_flags: <defaults>
</compile_context>

<pallas_src>
import jax
import jax.numpy as jnp
from jax.experimental import pallas as pl
from jax.experimental.pallas import tpu as pltpu


# ------------------------------- helpers -------------------------------------

def _round_up(n, m):
    return -(-n // m) * m


def _ln_relu(y, g, beta, eps=1e-5):
    # LayerNorm over the last dim (biased variance, matching nn.LayerNorm) + ReLU.
    # Always f32 (v5e VPU/EUP have no bf16; keeps 1e-4 parity).
    mean = jnp.mean(y, axis=-1, keepdims=True)
    var = jnp.mean((y - mean) ** 2, axis=-1, keepdims=True)
    yn = (y - mean) * jax.lax.rsqrt(var + eps)
    return jnp.maximum(yn * g + beta, 0.0)


# --------------------------- parameter packing --------------------------------

def _pack_params(arrays, lane_width):
    """Stack 2D arrays vertically into one (R, lane_width) f32 buffer.

    Every array starts at a multiple-of-8 row offset (sublane aligned) so the
    in-kernel static slices stay cheap.  Returns (buffer, [(off, rows, cols)]).
    In production this packing would be done once at model-load time.
    """
    offsets = []
    row = 0
    for a in arrays:
        offsets.append((row, a.shape[0], a.shape[1]))
        row += _round_up(a.shape[0], 8)
    buf = jnp.zeros((max(row, 8), lane_width), jnp.float32)
    for (off, r, c), a in zip(offsets, arrays):
        buf = buf.at[off:off + r, :c].set(a.astype(jnp.float32))
    return buf, offsets


# ------------------------------- fused kernel --------------------------------

def _make_fused_kernel(offsets, n_enc, n_dec, latent_dim, matmul_dtype):
    """Kernel closed over static layer counts and static packed-param offsets.

    Packed-param slot order:
      enc layer 0 : Wx, Wc, [b;gamma;beta]
      enc layer k : W, [b;gamma;beta]            (k = 1..n_enc-1)
      latent head : W_mulogvar, b_mulogvar
      dec layer 0 : Wz, Wc, [b;gamma;beta]
      dec layer k : W, [b;gamma;beta]            (k = 1..n_dec-1)
      output head : W, b
    """

    def get(p_ref, slot):
        off, r, c = offsets[slot]
        return p_ref[off:off + r, :c]            # static slice -> cheap view

    def mm(a, w):
        return jnp.dot(a.astype(matmul_dtype), w.astype(matmul_dtype),
                       preferred_element_type=jnp.float32)

    def kernel(x_ref, c_ref, e_ref, p_ref, out_ref):
        x = x_ref[...]
        c = c_ref[...]
        eps = e_ref[...]
        slot = 0

        # ---------------- encoder (concat folded into split weights) ---------
        wx, wc, bgb = get(p_ref, slot), get(p_ref, slot + 1), get(p_ref, slot + 2)
        slot += 3
        h = mm(x, wx) + mm(c, wc) + bgb[0:1, :]
        h = _ln_relu(h, bgb[1:2, :], bgb[2:3, :])
        for _ in range(n_enc - 1):
            w, bgb = get(p_ref, slot), get(p_ref, slot + 1)
            slot += 2
            h = _ln_relu(mm(h, w) + bgb[0:1, :], bgb[1:2, :], bgb[2:3, :])

        # ---------------- latent head (single (H, 2L) matmul) ----------------
        w, b = get(p_ref, slot), get(p_ref, slot + 1)
        slot += 2
        ml = mm(h, w) + b                          # (TB, 2L)  [mu | logvar]
        mu = ml[:, :latent_dim]
        logvar = ml[:, latent_dim:]
        z = eps * jnp.exp(0.5 * logvar) + mu       # train=True path, f32

        # ---------------- decoder (concat folded into split weights) ---------
        wz, wc2, bgb = get(p_ref, slot), get(p_ref, slot + 1), get(p_ref, slot + 2)
        slot += 3
        h = mm(z, wz) + mm(c, wc2) + bgb[0:1, :]
        h = _ln_relu(h, bgb[1:2, :], bgb[2:3, :])
        for _ in range(n_dec - 1):
            w, bgb = get(p_ref, slot), get(p_ref, slot + 1)
            slot += 2
            h = _ln_relu(mm(h, w) + bgb[0:1, :], bgb[1:2, :], bgb[2:3, :])

        # ---------------- output head + lane-dense packed store --------------
        w, b = get(p_ref, slot), get(p_ref, slot + 1)
        recon = mm(h, w) + b
        # Single wide store: [reconstruction | mu | logvar]
        out_ref[...] = jnp.concatenate([recon, ml], axis=-1)

    return kernel


# ------------------------------ kernel wrapper --------------------------------

def cvae_forward(params, x, cond, eps, latent_dim, matmul_dtype=jnp.float32):
    """x: (B,1,input_dim), cond: (B,1,cond_dim), eps: (B,latent_dim).

    matmul_dtype=jnp.bfloat16 is recommended on v6e/v7x for large hidden dims
    (LN/exp/reparam stay f32 regardless); default f32 preserves 1e-4 parity.
    """
    B = x.shape[0]
    input_dim = x.shape[-1]
    cond_dim = cond.shape[-1]

    x2 = x.reshape(B, input_dim).astype(jnp.float32)
    c2 = cond.reshape(B, cond_dim).astype(jnp.float32)
    e2 = eps.astype(jnp.float32)

    # Batch tiling: one big tile for B <= 1024 (block == full array, no pad);
    # 1024-row tiles for larger B, ragged last tile handled by Pallas masking.
    TB = B if B <= 1024 else 1024
    n_tiles = pl.cdiv(B, TB)

    n_enc = len(params["enc"])
    n_dec = len(params["dec"])

    # ---- pack all parameters into a single VMEM-resident buffer -------------
    def bgb(p):
        return jnp.concatenate([p["b"], p["gamma"], p["beta"]], axis=0)  # (3,H)

    arrays = []
    p0 = params["enc"][0]
    arrays += [p0["w"][:input_dim], p0["w"][input_dim:], bgb(p0)]
    for p in params["enc"][1:]:
        arrays += [p["w"], bgb(p)]
    arrays += [params["enc_linear"]["w"], params["enc_linear"]["b"]]
    d0 = params["dec"][0]
    arrays += [d0["w"][:latent_dim], d0["w"][latent_dim:], bgb(d0)]
    for p in params["dec"][1:]:
        arrays += [p["w"], bgb(p)]
    arrays += [params["dec_linear"]["w"], params["dec_linear"]["b"]]
    dec_out_dim = params["dec_linear"]["w"].shape[1]

    lane_w = _round_up(max(a.shape[1] for a in arrays), 128)
    pbuf, offsets = _pack_params(arrays, lane_w)
    R = pbuf.shape[0]

    slab_dim = dec_out_dim + 2 * latent_dim

    def batch_spec(d):
        return pl.BlockSpec((TB, d), lambda i: (i, 0))

    # Single-step grid: "arbitrary" (no point sharding sub-microsecond work).
    # Multi-step (large B): "parallel".  On v7x, pltpu.CORE_PARALLEL would give
    # true dual-TC sharding for genuinely large batches.
    sem = ("arbitrary",) if n_tiles == 1 else ("parallel",)

    slab = pl.pallas_call(
        _make_fused_kernel(offsets, n_enc, n_dec, latent_dim, matmul_dtype),
        out_shape=jax.ShapeDtypeStruct((B, slab_dim), jnp.float32),
        grid=(n_tiles,),
        in_specs=[
            batch_spec(input_dim),
            batch_spec(cond_dim),
            batch_spec(latent_dim),
            # One packed parameter buffer; constant block index -> fetched once,
            # VMEM-resident across the whole batch grid.
            pl.BlockSpec((R, lane_w), lambda i: (0, 0)),
        ],
        out_specs=batch_spec(slab_dim),
        compiler_params=pltpu.CompilerParams(dimension_semantics=sem),
    )(x2, c2, e2, pbuf)

    out = slab[:, :dec_out_dim].reshape(B, 1, dec_out_dim)
    mu = slab[:, dec_out_dim:dec_out_dim + latent_dim]
    logvar = slab[:, dec_out_dim + latent_dim:]
    return out, mu, logvar


# ------------------------------- parameters ---------------------------------

def xavier_uniform(key, fan_in, fan_out):
    limit = (6.0 / (fan_in + fan_out)) ** 0.5  # gain('linear') == 1
    return jax.random.uniform(key, (fan_in, fan_out), jnp.float32, -limit, limit)


def linear_bias(key, fan_in, fan_out):
    bound = 1.0 / (fan_in ** 0.5)
    return jax.random.uniform(key, (1, fan_out), jnp.float32, -bound, bound)


def init_cvae_params(key, input_dim, cond_dim, hidden_dims, latent_dim):
    params = {"enc": [], "dec": []}
    enc_dims = list(zip([input_dim + cond_dim] + hidden_dims, hidden_dims))
    for din, dout in enc_dims:
        key, k1, k2 = jax.random.split(key, 3)
        params["enc"].append({
            "w": xavier_uniform(k1, din, dout),
            "b": linear_bias(k2, din, dout),
            "gamma": jnp.ones((1, dout), jnp.float32),   # nn.LayerNorm defaults
            "beta": jnp.zeros((1, dout), jnp.float32),
        })
    key, k1, k2 = jax.random.split(key, 3)
    params["enc_linear"] = {
        "w": xavier_uniform(k1, hidden_dims[-1], 2 * latent_dim),
        "b": linear_bias(k2, hidden_dims[-1], 2 * latent_dim),
    }
    rev = hidden_dims[::-1]
    dec_dims = list(zip([latent_dim + cond_dim] + rev, rev))
    for din, dout in dec_dims:
        key, k1, k2 = jax.random.split(key, 3)
        params["dec"].append({
            "w": xavier_uniform(k1, din, dout),
            "b": linear_bias(k2, din, dout),
            "gamma": jnp.ones((1, dout), jnp.float32),
            "beta": jnp.zeros((1, dout), jnp.float32),
        })
    key, k1, k2 = jax.random.split(key, 3)
    decoder_output_dim = input_dim  # identity pxz head
    params["dec_linear"] = {
        "w": xavier_uniform(k1, rev[-1], decoder_output_dim),
        "b": linear_bias(k2, rev[-1], decoder_output_dim),
    }
    return params


# ------------------------------ pure-JAX reference ---------------------------

def ref_forward(params, x, cond, eps, latent_dim):
    def lin_ln_relu(h, p):
        y = h @ p["w"] + p["b"]
        mean = jnp.mean(y, axis=-1, keepdims=True)
        var = jnp.mean((y - mean) ** 2, axis=-1, keepdims=True)
        yn = (y - mean) / jnp.sqrt(var + 1e-5)
        return jnp.maximum(yn * p["gamma"] + p["beta"], 0.0)

    B = x.shape[0]
    h = jnp.concatenate([x, cond], axis=2).reshape(B, -1)
    for p in params["enc"]:
        h = lin_ln_relu(h, p)
    ml = h @ params["enc_linear"]["w"] + params["enc_linear"]["b"]
    mu, logvar = ml[:, :latent_dim], ml[:, latent_dim:]
    z = eps * jnp.exp(0.5 * logvar) + mu
    h = jnp.concatenate([z, cond.reshape(B, -1)], axis=1)
    for p in params["dec"]:
        h = lin_ln_relu(h, p)
    out = h @ params["dec_linear"]["w"] + params["dec_linear"]["b"]
    return out.reshape(B, 1, -1), mu, logvar


# ---------------------------------- main -------------------------------------

if __name__ == "__main__":
    B = 16
    input_dim = 32
    cond_dim = 16
    hidden_dims = [64, 32]
    latent_dim = 8

    key = jax.random.PRNGKey(0)
    kp, kx, kc, ke = jax.random.split(key, 4)

    params = init_cvae_params(kp, input_dim, cond_dim, hidden_dims, latent_dim)
    x = jax.random.normal(kx, (B, 1, input_dim), jnp.float32)
    cond = jax.random.normal(kc, (B, 1, cond_dim), jnp.float32)
    eps = jax.random.normal(ke, (B, latent_dim), jnp.float32)

    out, mu, logvar = cvae_forward(params, x, cond, eps, latent_dim)
    out = jax.block_until_ready(out)

    ref_out, ref_mu, ref_logvar = ref_forward(params, x, cond, eps, latent_dim)
    assert out.shape == (B, 1, input_dim)
    assert jnp.allclose(out, ref_out, atol=1e-4, rtol=1e-4)
    assert jnp.allclose(mu, ref_mu, atol=1e-4, rtol=1e-4)
    assert jnp.allclose(logvar, ref_logvar, atol=1e-4, rtol=1e-4)

    print("KERNEL_OK")
</pallas_src>

<mosaic_0001>
module attributes {stable_mosaic.version = 11 : i64} {
  func.func @kernel(%arg0: i32, %arg1: memref<16x32xf32, #tpu.memory_space<vmem>>, %arg2: memref<16x16xf32, #tpu.memory_space<vmem>>, %arg3: memref<16x8xf32, #tpu.memory_space<vmem>>, %arg4: memref<312x128xf32, #tpu.memory_space<vmem>>, %arg5: memref<16x48xf32, #tpu.memory_space<vmem>>) attributes {dimension_semantics = [#tpu.dimension_semantics<arbitrary>], iteration_bounds = array<i64: 1>, scalar_prefetch = 0 : i64, scratch_operands = 0 : i64, tpu.core_type = #tpu.core_type<tc>, window_params = [{transform_indices = @transform_0, window_bounds = array<i64: 16, 32>}, {transform_indices = @transform_1, window_bounds = array<i64: 16, 16>}, {transform_indices = @transform_2, window_bounds = array<i64: 16, 8>}, {pipeline_mode = #tpu.pipeline_mode<synchronous>, transform_indices = @transform_3, window_bounds = array<i64: 312, 128>}, {transform_indices = @transform_4, window_bounds = array<i64: 16, 48>}]} {
    %c0 = arith.constant 0 : index
    %c0_0 = arith.constant 0 : index
    %0 = vector.load %arg1[%c0, %c0_0] : memref<16x32xf32, #tpu.memory_space<vmem>>, vector<16x32xf32>
    %c0_1 = arith.constant 0 : index
    %c0_2 = arith.constant 0 : index
    %1 = vector.load %arg2[%c0_1, %c0_2] : memref<16x16xf32, #tpu.memory_space<vmem>>, vector<16x16xf32>
    %c0_3 = arith.constant 0 : index
    %c0_4 = arith.constant 0 : index
    %2 = vector.load %arg3[%c0_3, %c0_4] : memref<16x8xf32, #tpu.memory_space<vmem>>, vector<16x8xf32>
    %c0_5 = arith.constant 0 : index
    %c0_6 = arith.constant 0 : index
    %3 = vector.load %arg4[%c0_5, %c0_6] : memref<312x128xf32, #tpu.memory_space<vmem>>, vector<32x64xf32>
    %c32 = arith.constant 32 : index
    %c0_7 = arith.constant 0 : index
    %4 = vector.load %arg4[%c32, %c0_7] : memref<312x128xf32, #tpu.memory_space<vmem>>, vector<16x64xf32>
    %c48 = arith.constant 48 : index
    %c0_8 = arith.constant 0 : index
    %5 = vector.load %arg4[%c48, %c0_8] : memref<312x128xf32, #tpu.memory_space<vmem>>, vector<3x64xf32>
    %cst = arith.constant dense<0.000000e+00> : vector<16x64xf32>
    %6 = tpu.matmul %0, %3, %cst {dimension_numbers = #tpu.dot_dimension_numbers<[1], [0], [0], [1], [0, 0, 1, 1], [], []>} : vector<16x32xf32>, vector<32x64xf32>, vector<16x64xf32> -> vector<16x64xf32>
    %cst_9 = arith.constant dense<0.000000e+00> : vector<16x64xf32>
    %7 = tpu.matmul %1, %4, %cst_9 {dimension_numbers = #tpu.dot_dimension_numbers<[1], [0], [0], [1], [0, 0, 1, 1], [], []>} : vector<16x16xf32>, vector<16x64xf32>, vector<16x64xf32> -> vector<16x64xf32>
    %8 = arith.addf %6, %7 : vector<16x64xf32>
    %9 = vector.extract_strided_slice %5 {offsets = [0, 0], sizes = [1, 64], strides = [1, 1]} : vector<3x64xf32> to vector<1x64xf32>
    %10 = vector.broadcast %9 : vector<1x64xf32> to vector<16x64xf32>
    %11 = arith.addf %8, %10 : vector<16x64xf32>
    %12 = vector.extract_strided_slice %5 {offsets = [1, 0], sizes = [1, 64], strides = [1, 1]} : vector<3x64xf32> to vector<1x64xf32>
    %13 = vector.extract_strided_slice %5 {offsets = [2, 0], sizes = [1, 64], strides = [1, 1]} : vector<3x64xf32> to vector<1x64xf32>
    %cst_10 = arith.constant dense<0.000000e+00> : vector<16xf32>
    %14 = vector.multi_reduction <add>, %11, %cst_10 [1] : vector<16x64xf32> to vector<16xf32>
    %15 = vector.shape_cast %14 : vector<16xf32> to vector<16x1xf32>
    %cst_11 = arith.constant 6.400000e+01 : f32
    %16 = vector.broadcast %cst_11 : f32 to vector<16x1xf32>
    %17 = arith.divf %15, %16 : vector<16x1xf32>
    %18 = vector.broadcast %17 : vector<16x1xf32> to vector<16x64xf32>
    %19 = arith.subf %11, %18 : vector<16x64xf32>
    %20 = arith.mulf %19, %19 : vector<16x64xf32>
    %cst_12 = arith.constant dense<0.000000e+00> : vector<16xf32>
    %21 = vector.multi_reduction <add>, %20, %cst_12 [1] : vector<16x64xf32> to vector<16xf32>
    %22 = vector.shape_cast %21 : vector<16xf32> to vector<16x1xf32>
    %cst_13 = arith.constant 6.400000e+01 : f32
    %23 = vector.broadcast %cst_13 : f32 to vector<16x1xf32>
    %24 = arith.divf %22, %23 : vector<16x1xf32>
    %25 = vector.broadcast %17 : vector<16x1xf32> to vector<16x64xf32>
    %26 = arith.subf %11, %25 : vector<16x64xf32>
    %cst_14 = arith.constant 9.99999974E-6 : f32
    %27 = vector.broadcast %cst_14 : f32 to vector<16x1xf32>
    %28 = arith.addf %24, %27 : vector<16x1xf32>
    %29 = math.rsqrt %28 : vector<16x1xf32>
    %30 = vector.broadcast %29 : vector<16x1xf32> to vector<16x64xf32>
    %31 = arith.mulf %26, %30 : vector<16x64xf32>
    %32 = vector.broadcast %12 : vector<1x64xf32> to vector<16x64xf32>
    %33 = arith.mulf %31, %32 : vector<16x64xf32>
    %34 = vector.broadcast %13 : vector<1x64xf32> to vector<16x64xf32>
    %35 = arith.addf %33, %34 : vector<16x64xf32>
    %cst_15 = arith.constant 0.000000e+00 : f32
    %36 = vector.broadcast %cst_15 : f32 to vector<16x64xf32>
    %37 = arith.maximumf %35, %36 : vector<16x64xf32>
    %c56 = arith.constant 56 : index
    %c0_16 = arith.constant 0 : index
    %38 = vector.load %arg4[%c56, %c0_16] : memref<312x128xf32, #tpu.memory_space<vmem>>, vector<64x32xf32>
    %c120 = arith.constant 120 : index
    %c0_17 = arith.constant 0 : index
    %39 = vector.load %arg4[%c120, %c0_17] : memref<312x128xf32, #tpu.memory_space<vmem>>, vector<3x32xf32>
    %cst_18 = arith.constant dense<0.000000e+00> : vector<16x32xf32>
    %40 = tpu.matmul %37, %38, %cst_18 {dimension_numbers = #tpu.dot_dimension_numbers<[1], [0], [0], [1], [0, 0, 1, 1], [], []>} : vector<16x64xf32>, vector<64x32xf32>, vector<16x32xf32> -> vector<16x32xf32>
    %41 = vector.extract_strided_slice %39 {offsets = [0, 0], sizes = [1, 32], strides = [1, 1]} : vector<3x32xf32> to vector<1x32xf32>
    %42 = vector.broadcast %41 : vector<1x32xf32> to vector<16x32xf32>
    %43 = arith.addf %40, %42 : vector<16x32xf32>
    %44 = vector.extract_strided_slice %39 {offsets = [1, 0], sizes = [1, 32], strides = [1, 1]} : vector<3x32xf32> to vector<1x32xf32>
    %45 = vector.extract_strided_slice %39 {offsets = [2, 0], sizes = [1, 32], strides = [1, 1]} : vector<3x32xf32> to vector<1x32xf32>
    %cst_19 = arith.constant dense<0.000000e+00> : vector<16xf32>
    %46 = vector.multi_reduction <add>, %43, %cst_19 [1] : vector<16x32xf32> to vector<16xf32>
    %47 = vector.shape_cast %46 : vector<16xf32> to vector<16x1xf32>
    %cst_20 = arith.constant 3.200000e+01 : f32
    %48 = vector.broadcast %cst_20 : f32 to vector<16x1xf32>
    %49 = arith.divf %47, %48 : vector<16x1xf32>
    %50 = vector.broadcast %49 : vector<16x1xf32> to vector<16x32xf32>
    %51 = arith.subf %43, %50 : vector<16x32xf32>
    %52 = arith.mulf %51, %51 : vector<16x32xf32>
    %cst_21 = arith.constant dense<0.000000e+00> : vector<16xf32>
    %53 = vector.multi_reduction <add>, %52, %cst_21 [1] : vector<16x32xf32> to vector<16xf32>
    %54 = vector.shape_cast %53 : vector<16xf32> to vector<16x1xf32>
    %cst_22 = arith.constant 3.200000e+01 : f32
    %55 = vector.broadcast %cst_22 : f32 to vector<16x1xf32>
    %56 = arith.divf %54, %55 : vector<16x1xf32>
    %57 = vector.broadcast %49 : vector<16x1xf32> to vector<16x32xf32>
    %58 = arith.subf %43, %57 : vector<16x32xf32>
    %cst_23 = arith.constant 9.99999974E-6 : f32
    %59 = vector.broadcast %cst_23 : f32 to vector<16x1xf32>
    %60 = arith.addf %56, %59 : vector<16x1xf32>
    %61 = math.rsqrt %60 : vector<16x1xf32>
    %62 = vector.broadcast %61 : vector<16x1xf32> to vector<16x32xf32>
    %63 = arith.mulf %58, %62 : vector<16x32xf32>
    %64 = vector.broadcast %44 : vector<1x32xf32> to vector<16x32xf32>
    %65 = arith.mulf %63, %64 : vector<16x32xf32>
    %66 = vector.broadcast %45 : vector<1x32xf32> to vector<16x32xf32>
    %67 = arith.addf %65, %66 : vector<16x32xf32>
    %cst_24 = arith.constant 0.000000e+00 : f32
    %68 = vector.broadcast %cst_24 : f32 to vector<16x32xf32>
    %69 = arith.maximumf %67, %68 : vector<16x32xf32>
    %c128 = arith.constant 128 : index
    %c0_25 = arith.constant 0 : index
    %70 = vector.load %arg4[%c128, %c0_25] : memref<312x128xf32, #tpu.memory_space<vmem>>, vector<32x16xf32>
    %c160 = arith.constant 160 : index
    %c0_26 = arith.constant 0 : index
    %71 = vector.load %arg4[%c160, %c0_26] : memref<312x128xf32, #tpu.memory_space<vmem>>, vector<1x16xf32>
    %cst_27 = arith.constant dense<0.000000e+00> : vector<16x16xf32>
    %72 = tpu.matmul %69, %70, %cst_27 {dimension_numbers = #tpu.dot_dimension_numbers<[1], [0], [0], [1], [0, 0, 1, 1], [], []>} : vector<16x32xf32>, vector<32x16xf32>, vector<16x16xf32> -> vector<16x16xf32>
    %73 = vector.broadcast %71 : vector<1x16xf32> to vector<16x16xf32>
    %74 = arith.addf %72, %73 : vector<16x16xf32>
    %75 = vector.extract_strided_slice %74 {offsets = [0, 0], sizes = [16, 8], strides = [1, 1]} : vector<16x16xf32> to vector<16x8xf32>
    %76 = vector.extract_strided_slice %74 {offsets = [0, 8], sizes = [16, 8], strides = [1, 1]} : vector<16x16xf32> to vector<16x8xf32>
    %cst_28 = arith.constant 5.000000e-01 : f32
    %77 = vector.broadcast %cst_28 : f32 to vector<16x8xf32>
    %78 = arith.mulf %77, %76 : vector<16x8xf32>
    %79 = math.exp %78 : vector<16x8xf32>
    %80 = arith.mulf %2, %79 : vector<16x8xf32>
    %81 = arith.addf %80, %75 : vector<16x8xf32>
    %c168 = arith.constant 168 : index
    %c0_29 = arith.constant 0 : index
    %82 = vector.load %arg4[%c168, %c0_29] : memref<312x128xf32, #tpu.memory_space<vmem>>, vector<8x32xf32>
    %c176 = arith.constant 176 : index
    %c0_30 = arith.constant 0 : index
    %83 = vector.load %arg4[%c176, %c0_30] : memref<312x128xf32, #tpu.memory_space<vmem>>, vector<16x32xf32>
    %c192 = arith.constant 192 : index
    %c0_31 = arith.constant 0 : index
    %84 = vector.load %arg4[%c192, %c0_31] : memref<312x128xf32, #tpu.memory_space<vmem>>, vector<3x32xf32>
    %cst_32 = arith.constant dense<0.000000e+00> : vector<16x32xf32>
    %85 = tpu.matmul %81, %82, %cst_32 {dimension_numbers = #tpu.dot_dimension_numbers<[1], [0], [0], [1], [0, 0, 1, 1], [], []>} : vector<16x8xf32>, vector<8x32xf32>, vector<16x32xf32> -> vector<16x32xf32>
    %cst_33 = arith.constant dense<0.000000e+00> : vector<16x32xf32>
    %86 = tpu.matmul %1, %83, %cst_33 {dimension_numbers = #tpu.dot_dimension_numbers<[1], [0], [0], [1], [0, 0, 1, 1], [], []>} : vector<16x16xf32>, vector<16x32xf32>, vector<16x32xf32> -> vector<16x32xf32>
    %87 = arith.addf %85, %86 : vector<16x32xf32>
    %88 = vector.extract_strided_slice %84 {offsets = [0, 0], sizes = [1, 32], strides = [1, 1]} : vector<3x32xf32> to vector<1x32xf32>
    %89 = vector.broadcast %88 : vector<1x32xf32> to vector<16x32xf32>
    %90 = arith.addf %87, %89 : vector<16x32xf32>
    %91 = vector.extract_strided_slice %84 {offsets = [1, 0], sizes = [1, 32], strides = [1, 1]} : vector<3x32xf32> to vector<1x32xf32>
    %92 = vector.extract_strided_slice %84 {offsets = [2, 0], sizes = [1, 32], strides = [1, 1]} : vector<3x32xf32> to vector<1x32xf32>
    %cst_34 = arith.constant dense<0.000000e+00> : vector<16xf32>
    %93 = vector.multi_reduction <add>, %90, %cst_34 [1] : vector<16x32xf32> to vector<16xf32>
    %94 = vector.shape_cast %93 : vector<16xf32> to vector<16x1xf32>
    %cst_35 = arith.constant 3.200000e+01 : f32
    %95 = vector.broadcast %cst_35 : f32 to vector<16x1xf32>
    %96 = arith.divf %94, %95 : vector<16x1xf32>
    %97 = vector.broadcast %96 : vector<16x1xf32> to vector<16x32xf32>
    %98 = arith.subf %90, %97 : vector<16x32xf32>
    %99 = arith.mulf %98, %98 : vector<16x32xf32>
    %cst_36 = arith.constant dense<0.000000e+00> : vector<16xf32>
    %100 = vector.multi_reduction <add>, %99, %cst_36 [1] : vector<16x32xf32> to vector<16xf32>
    %101 = vector.shape_cast %100 : vector<16xf32> to vector<16x1xf32>
    %cst_37 = arith.constant 3.200000e+01 : f32
    %102 = vector.broadcast %cst_37 : f32 to vector<16x1xf32>
    %103 = arith.divf %101, %102 : vector<16x1xf32>
    %104 = vector.broadcast %96 : vector<16x1xf32> to vector<16x32xf32>
    %105 = arith.subf %90, %104 : vector<16x32xf32>
    %cst_38 = arith.constant 9.99999974E-6 : f32
    %106 = vector.broadcast %cst_38 : f32 to vector<16x1xf32>
    %107 = arith.addf %103, %106 : vector<16x1xf32>
    %108 = math.rsqrt %107 : vector<16x1xf32>
    %109 = vector.broadcast %108 : vector<16x1xf32> to vector<16x32xf32>
    %110 = arith.mulf %105, %109 : vector<16x32xf32>
    %111 = vector.broadcast %91 : vector<1x32xf32> to vector<16x32xf32>
    %112 = arith.mulf %110, %111 : vector<16x32xf32>
    %113 = vector.broadcast %92 : vector<1x32xf32> to vector<16x32xf32>
    %114 = arith.addf %112, %113 : vector<16x32xf32>
    %cst_39 = arith.constant 0.000000e+00 : f32
    %115 = vector.broadcast %cst_39 : f32 to vector<16x32xf32>
    %116 = arith.maximumf %114, %115 : vector<16x32xf32>
    %c200 = arith.constant 200 : index
    %c0_40 = arith.constant 0 : index
    %117 = vector.load %arg4[%c200, %c0_40] : memref<312x128xf32, #tpu.memory_space<vmem>>, vector<32x64xf32>
    %c232 = arith.constant 232 : index
    %c0_41 = arith.constant 0 : index
    %118 = vector.load %arg4[%c232, %c0_41] : memref<312x128xf32, #tpu.memory_space<vmem>>, vector<3x64xf32>
    %cst_42 = arith.constant dense<0.000000e+00> : vector<16x64xf32>
    %119 = tpu.matmul %116, %117, %cst_42 {dimension_numbers = #tpu.dot_dimension_numbers<[1], [0], [0], [1], [0, 0, 1, 1], [], []>} : vector<16x32xf32>, vector<32x64xf32>, vector<16x64xf32> -> vector<16x64xf32>
    %120 = vector.extract_strided_slice %118 {offsets = [0, 0], sizes = [1, 64], strides = [1, 1]} : vector<3x64xf32> to vector<1x64xf32>
    %121 = vector.broadcast %120 : vector<1x64xf32> to vector<16x64xf32>
    %122 = arith.addf %119, %121 : vector<16x64xf32>
    %123 = vector.extract_strided_slice %118 {offsets = [1, 0], sizes = [1, 64], strides = [1, 1]} : vector<3x64xf32> to vector<1x64xf32>
    %124 = vector.extract_strided_slice %118 {offsets = [2, 0], sizes = [1, 64], strides = [1, 1]} : vector<3x64xf32> to vector<1x64xf32>
    %cst_43 = arith.constant dense<0.000000e+00> : vector<16xf32>
    %125 = vector.multi_reduction <add>, %122, %cst_43 [1] : vector<16x64xf32> to vector<16xf32>
    %126 = vector.shape_cast %125 : vector<16xf32> to vector<16x1xf32>
    %cst_44 = arith.constant 6.400000e+01 : f32
    %127 = vector.broadcast %cst_44 : f32 to vector<16x1xf32>
    %128 = arith.divf %126, %127 : vector<16x1xf32>
    %129 = vector.broadcast %128 : vector<16x1xf32> to vector<16x64xf32>
    %130 = arith.subf %122, %129 : vector<16x64xf32>
    %131 = arith.mulf %130, %130 : vector<16x64xf32>
    %cst_45 = arith.constant dense<0.000000e+00> : vector<16xf32>
    %132 = vector.multi_reduction <add>, %131, %cst_45 [1] : vector<16x64xf32> to vector<16xf32>
    %133 = vector.shape_cast %132 : vector<16xf32> to vector<16x1xf32>
    %cst_46 = arith.constant 6.400000e+01 : f32
    %134 = vector.broadcast %cst_46 : f32 to vector<16x1xf32>
    %135 = arith.divf %133, %134 : vector<16x1xf32>
    %136 = vector.broadcast %128 : vector<16x1xf32> to vector<16x64xf32>
    %137 = arith.subf %122, %136 : vector<16x64xf32>
    %cst_47 = arith.constant 9.99999974E-6 : f32
    %138 = vector.broadcast %cst_47 : f32 to vector<16x1xf32>
    %139 = arith.addf %135, %138 : vector<16x1xf32>
    %140 = math.rsqrt %139 : vector<16x1xf32>
    %141 = vector.broadcast %140 : vector<16x1xf32> to vector<16x64xf32>
    %142 = arith.mulf %137, %141 : vector<16x64xf32>
    %143 = vector.broadcast %123 : vector<1x64xf32> to vector<16x64xf32>
    %144 = arith.mulf %142, %143 : vector<16x64xf32>
    %145 = vector.broadcast %124 : vector<1x64xf32> to vector<16x64xf32>
    %146 = arith.addf %144, %145 : vector<16x64xf32>
    %cst_48 = arith.constant 0.000000e+00 : f32
    %147 = vector.broadcast %cst_48 : f32 to vector<16x64xf32>
    %148 = arith.maximumf %146, %147 : vector<16x64xf32>
    %c240 = arith.constant 240 : index
    %c0_49 = arith.constant 0 : index
    %149 = vector.load %arg4[%c240, %c0_49] : memref<312x128xf32, #tpu.memory_space<vmem>>, vector<64x32xf32>
    %c304 = arith.constant 304 : index
    %c0_50 = arith.constant 0 : index
    %150 = vector.load %arg4[%c304, %c0_50] : memref<312x128xf32, #tpu.memory_space<vmem>>, vector<1x32xf32>
    %cst_51 = arith.constant dense<0.000000e+00> : vector<16x32xf32>
    %151 = tpu.matmul %148, %149, %cst_51 {dimension_numbers = #tpu.dot_dimension_numbers<[1], [0], [0], [1], [0, 0, 1, 1], [], []>} : vector<16x64xf32>, vector<64x32xf32>, vector<16x32xf32> -> vector<16x32xf32>
    %152 = vector.broadcast %150 : vector<1x32xf32> to vector<16x32xf32>
    %153 = arith.addf %151, %152 : vector<16x32xf32>
    %154 = tpu.concatenate %153, %74 in 1 : vector<16x32xf32>, vector<16x16xf32> -> vector<16x48xf32>
    %c0_52 = arith.constant 0 : index
    %c0_53 = arith.constant 0 : index
    %155 = vector.load %arg5[%c0_52, %c0_53] : memref<16x48xf32, #tpu.memory_space<vmem>>, vector<16x48xf32>
    tpu.vector_store %arg5[%c0_52, %c0_53], %154 {strides = array<i32>} : memref<16x48xf32, #tpu.memory_space<vmem>>, vector<16x48xf32>,
    return
  }
  func.func @transform_0(%arg0: i32) -> (i32, i32) {
    %c0_i32 = arith.constant 0 : i32
    %c0_i32_0 = arith.constant 0 : i32
    return %arg0, %c0_i32 : i32, i32
  }
  func.func @transform_1(%arg0: i32) -> (i32, i32) {
    %c0_i32 = arith.constant 0 : i32
    %c0_i32_0 = arith.constant 0 : i32
    return %arg0, %c0_i32 : i32, i32
  }
  func.func @transform_2(%arg0: i32) -> (i32, i32) {
    %c0_i32 = arith.constant 0 : i32
    %c0_i32_0 = arith.constant 0 : i32
    return %arg0, %c0_i32 : i32, i32
  }
  func.func @transform_3(%arg0: i32) -> (i32, i32) {
    %c0_i32 = arith.constant 0 : i32
    %c0_i32_0 = arith.constant 0 : i32
    %c0_i32_1 = arith.constant 0 : i32
    return %c0_i32, %c0_i32_0 : i32, i32
  }
  func.func @transform_4(%arg0: i32) -> (i32, i32) {
    %c0_i32 = arith.constant 0 : i32
    %c0_i32_0 = arith.constant 0 : i32
    return %arg0, %c0_i32 : i32, i32
  }
}

</mosaic_0001>

<llo_original>
// kernel: tpu_custom_call.1
$region0: #{tpu_custom_call.1}
  #allocation0 [shape = 'u32[]', space=smem, size = 0x4, offset = 0x4, fixed_abs, tag = 'smem constant byte address 0x4 - core index']
  #allocation1 [shape = 'u32[144,128]{1,0:T(1,128)}', space=vmem, size = 0x12000, scoped, tag = 'internal scratch']
  %s0 = inlined_call_operand.vmem [shape: f32[16,32], index: 0, kind: input, shape index: {}]
  %s1 = inlined_call_operand.hbm [shape: f32[16,16], index: 1, kind: input, shape index: {}]
  %s2 = inlined_call_operand.vmem [shape: f32[16,8], index: 2, kind: input, shape index: {}]
  %s3 = inlined_call_operand.hbm [shape: f32[312,128], index: 3, kind: input, shape index: {}]
  %s4 = inlined_call_operand.hbm [shape: f32[16,48], index: 4, kind: output, shape index: {}]
  %s5 = sld [smem:[#allocation0]]
  $region34: #{tpu_custom_call.1} parent=0
    _
  %s7 = ssub.s32 1, %s5
  %s8 = scalar_select 0, %s7, %s5
  $region1: #{tpu_custom_call.1} parent=0
    #allocation2 [shape = 'u8[8192]{0}', space=vmem, size = 0x2000, scoped, tag = 'input window, operand 1, single buffered']
    #allocation3 [shape = 's32[1]{0}', space=sflag, size = 0x4, scoped, tag = 'scoped memory for tpu_custom_call.1']
    #allocation4 [shape = 's32[1]{0}', space=sflag, size = 0x4, scoped, tag = 'scoped memory for tpu_custom_call.1']
    #allocation5 [shape = 'u8[159744]{0}', space=vmem, size = 0x27000, scoped, tag = 'input window, operand 3, single buffered']
    #allocation6 [shape = 's32[1]{0}', space=sflag, size = 0x4, scoped, tag = 'scoped memory for tpu_custom_call.1']
    #allocation7 [shape = 'u8[8192]{0}', space=vmem, size = 0x2000, scoped, tag = 'output window, operand 0, single buffered']
    %9 = vsyncpa [#allocation3], 0
    %10 = vsyncpa [#allocation6], 0
    %11 = vsyncpa [#allocation4], 0
    // Predicated region
    $region2: #{tpu_custom_call.1} parent=1 // pred_check
      _
    $region3: #{tpu_custom_call.1} parent=1 // pred_check_branch
      %13 = sbr.rel (0) target = $region5
    $region4: #{tpu_custom_call.1} parent=1 // pred_region
      _
    $region5: #{tpu_custom_call.1} parent=1 // pred_fallthru
      _
    // Predicated region
    $region6: #{tpu_custom_call.1} parent=1 // pred_check
      _
    $region7: #{tpu_custom_call.1} parent=1 // pred_check_branch
      %15 = sbr.rel (0) target = $region9
    $region8: #{tpu_custom_call.1} parent=1 // pred_region
      %s17 = ssub.s32 256, 256
      %18 = vsyncadd [#allocation3], %s17
      %s19 = sshll.u32 [#allocation2], 4
      %s20 = int_to_ptr.vmem [resolvable:$true] %s19
      %25 = dma.hbm_to_vmem [thread:$0]  %s1, 256, %s20, [#allocation3], 128, 128, 8
    $region9: #{tpu_custom_call.1} parent=1 // pred_fallthru
      _
    // Predicated region
    $region10: #{tpu_custom_call.1} parent=1 // pred_check
      _
    $region11: #{tpu_custom_call.1} parent=1 // pred_check_branch
      %27 = sbr.rel (0) target = $region13
    $region12: #{tpu_custom_call.1} parent=1 // pred_region
      _
    $region13: #{tpu_custom_call.1} parent=1 // pred_fallthru
      _
    // Predicated region
    $region14: #{tpu_custom_call.1} parent=1 // pred_check
      _
    $region15: #{tpu_custom_call.1} parent=1 // pred_check_branch
      %29 = sbr.rel (0) target = $region17
    $region16: #{tpu_custom_call.1} parent=1 // pred_region
      %s31 = ssub.s32 4992, 4992
      %32 = vsyncadd [#allocation6], %s31
      %s33 = sshll.u32 [#allocation5], 4
      %s34 = int_to_ptr.vmem [resolvable:$true] %s33
      %39 = dma.hbm_to_vmem [thread:$0]  %s3, 4992, %s34, [#allocation6], 128, 128, 8
    $region17: #{tpu_custom_call.1} parent=1 // pred_fallthru
      _
    // Predicated region
    $region18: #{tpu_custom_call.1} parent=1 // pred_check
      _
    $region19: #{tpu_custom_call.1} parent=1 // pred_check_branch
      %41 = sbr.rel (0) target = $region21
    $region20: #{tpu_custom_call.1} parent=1 // pred_region
      %42 = dma.done [#allocation3], 256
    $region21: #{tpu_custom_call.1} parent=1 // pred_fallthru
      _
    // Predicated region
    $region22: #{tpu_custom_call.1} parent=1 // pred_check
      _
    $region23: #{tpu_custom_call.1} parent=1 // pred_check_branch
      %44 = sbr.rel (0) target = $region25
    $region24: #{tpu_custom_call.1} parent=1 // pred_region
      %45 = dma.done [#allocation6], 4992
    $region25: #{tpu_custom_call.1} parent=1 // pred_fallthru
      _
    %v46 = vld [vmem:[%s0] sm:$0xff]
    %v47 = vld [vmem:[%s0 + $0x8] sm:$0xff]
    %v48 = vld [vmem:[#allocation2] sm:$0xff]
    %v49 = vld [vmem:[#allocation2 + $0x8] sm:$0xff]
    %v50 = vld [vmem:[%s2] sm:$0xff]
    %v51 = vld [vmem:[%s2 + $0x8] sm:$0xff]
    %v52 = vld [vmem:[#allocation5] sm:$0xff]
    %v53 = vld [vmem:[#allocation5 + $0x8] sm:$0xff]
    %v54 = vld [vmem:[#allocation5 + $0x10] sm:$0xff]
    %v55 = vld [vmem:[#allocation5 + $0x18] sm:$0xff]
    %v56 = vld [vmem:[#allocation5 + $0x20] sm:$0xff]
    %v57 = vld [vmem:[#allocation5 + $0x28] sm:$0xff]
    %v58 = vld [vmem:[#allocation5 + $0x30] sm:$0x7]
    %vm59 = vcmask 130048
    %v61 = vsel %vm59, %v48, 0
    %v64 = vsel %vm59, %v49, 0
    %66 = vmatprep.subr.mxu0 0.0
    %67 = vmatpush1.msra.mxu0 %v56
    %68 = vmatprep.subr.mxu0 0.0
    %69 = vmatpush1.msra.mxu0 %v57
    %70 = vmatprep.subr.mxu0 0.0
    %71 = vmatpush1.msra.mxu0 0.0
    %72 = vmatprep.subr.mxu0 0.0
    %73 = vmatpush1.msra.mxu0 0.0
    %74 = vmatprep.subr.mxu0 0.0
    %75 = vmatpush1.msra.mxu0 0.0
    %76 = vmatprep.subr.mxu0 0.0
    %77 = vmatpush1.msra.mxu0 0.0
    %78 = vmatprep.subr.mxu0 0.0
    %79 = vmatpush1.msra.mxu0 0.0
    %80 = vmatprep.subr.mxu0 0.0
    %81 = vmatpush1.msra.mxu0 0.0
    %82 = vmatprep.subr.mxu0 0.0
    %83 = vmatpush1.msra.mxu0 0.0
    %84 = vmatprep.subr.mxu0 0.0
    %85 = vmatpush1.msra.mxu0 0.0
    %86 = vmatprep.subr.mxu0 0.0
    %87 = vmatpush1.msra.mxu0 0.0
    %88 = vmatprep.subr.mxu0 0.0
    %89 = vmatpush1.msra.mxu0 0.0
    %90 = vmatprep.subr.mxu0 0.0
    %91 = vmatpush1.msra.mxu0 0.0
    %92 = vmatprep.subr.mxu0 0.0
    %93 = vmatpush1.msra.mxu0 0.0
    %94 = vmatprep.subr.mxu0 0.0
    %95 = vmatpush1.msra.mxu0 0.0
    %96 = vmatprep.subr.mxu0 0.0
    %97 = vmatpush1.msra.mxu0 0.0
    %98 = vmatprep.subr.mxu0 0.0
    %99 = vmatpush1.msra.mxu0 0.0
    %100 = vmatprep.subr.mxu0 0.0
    %101 = vmatpush1.msra.mxu0 0.0
    %102 = vmatprep.subr.mxu0 0.0
    %103 = vmatpush1.msra.mxu0 0.0
    %104 = vmatprep.subr.mxu0 0.0
    %105 = vmatpush1.msra.mxu0 0.0
    %106 = vmatprep.subr.mxu0 0.0
    %107 = vmatpush1.msra.mxu0 0.0
    %108 = vmatprep.subr.mxu0 0.0
    %109 = vmatpush1.msra.mxu0 0.0
    %110 = vmatprep.subr.mxu0 0.0
    %111 = vmatpush1.msra.mxu0 0.0
    %112 = vmatprep.subr.mxu0 0.0
    %113 = vmatpush1.msra.mxu0 0.0
    %114 = vmatprep.subr.mxu0 0.0
    %115 = vmatpush1.msra.mxu0 0.0
    %116 = vmatprep.subr.mxu0 0.0
    %117 = vmatpush1.msra.mxu0 0.0
    %118 = vmatprep.subr.mxu0 0.0
    %119 = vmatpush1.msra.mxu0 0.0
    %120 = vmatprep.subr.mxu0 0.0
    %121 = vmatpush1.msra.mxu0 0.0
    %122 = vmatprep.subr.mxu0 0.0
    %123 = vmatpush1.msra.mxu0 0.0
    %124 = vmatprep.subr.mxu0 0.0
    %125 = vmatpush1.msra.mxu0 0.0
    %126 = vmatprep.subr.mxu0 0.0
    %127 = vmatpush1.msra.mxu0 0.0
    %128 = vmatprep.subr.mxu0 0.0
    %129 = vmatpush1.msra.mxu0 0.0
    %130 = vmatprep.mubr.f32.mxu0 0.0
    %131 = vmatmul.mubr.f32.gmra.mrb[0].mxu0 %v61
    %v132 = vpop.f32.mrb[0].mxu0
    %v133 = vadd.f32 0.0, %v132
    %v134 = vpop.f32.mrb[0].mxu0
    %135 = vmatprep.mubr.f32.mxu0 0.0
    %136 = vmatmul.mubr.f32.gmra.mrb[0].mxu0 %v64
    %v137 = vpop.f32.mrb[0].mxu0
    %v138 = vadd.f32 0.0, %v137
    %v139 = vpop.f32.mrb[0].mxu0
    %140 = vdwg.mxu0
    %vm141 = vcmask 261120
    %v143 = vsel %vm141, %v46, 0
    %v146 = vsel %vm141, %v47, 0
    %148 = vmatprep.subr.mxu0 0.0
    %149 = vmatpush1.msra.mxu0 %v52
    %150 = vmatprep.subr.mxu0 0.0
    %151 = vmatpush1.msra.mxu0 %v53
    %152 = vmatprep.subr.mxu0 0.0
    %153 = vmatpush1.msra.mxu0 %v54
    %154 = vmatprep.subr.mxu0 0.0
    %155 = vmatpush1.msra.mxu0 %v55
    %156 = vmatprep.subr.mxu0 0.0
    %157 = vmatpush1.msra.mxu0 0.0
    %158 = vmatprep.subr.mxu0 0.0
    %159 = vmatpush1.msra.mxu0 0.0
    %160 = vmatprep.subr.mxu0 0.0
    %161 = vmatpush1.msra.mxu0 0.0
    %162 = vmatprep.subr.mxu0 0.0
    %163 = vmatpush1.msra.mxu0 0.0
    %164 = vmatprep.subr.mxu0 0.0
    %165 = vmatpush1.msra.mxu0 0.0
    %166 = vmatprep.subr.mxu0 0.0
    %167 = vmatpush1.msra.mxu0 0.0
    %168 = vmatprep.subr.mxu0 0.0
    %169 = vmatpush1.msra.mxu0 0.0
    %170 = vmatprep.subr.mxu0 0.0
    %171 = vmatpush1.msra.mxu0 0.0
    %172 = vmatprep.subr.mxu0 0.0
    %173 = vmatpush1.msra.mxu0 0.0
    %174 = vmatprep.subr.mxu0 0.0
    %175 = vmatpush1.msra.mxu0 0.0
    %176 = vmatprep.subr.mxu0 0.0
    %177 = vmatpush1.msra.mxu0 0.0
    %178 = vmatprep.subr.mxu0 0.0
    %179 = vmatpush1.msra.mxu0 0.0
    %180 = vmatprep.subr.mxu0 0.0
    %181 = vmatpush1.msra.mxu0 0.0
    %182 = vmatprep.subr.mxu0 0.0
    %183 = vmatpush1.msra.mxu0 0.0
    %184 = vmatprep.subr.mxu0 0.0
    %185 = vmatpush1.msra.mxu0 0.0
    %186 = vmatprep.subr.mxu0 0.0
    %187 = vmatpush1.msra.mxu0 0.0
    %188 = vmatprep.subr.mxu0 0.0
    %189 = vmatpush1.msra.mxu0 0.0
    %190 = vmatprep.subr.mxu0 0.0
    %191 = vmatpush1.msra.mxu0 0.0
    %192 = vmatprep.subr.mxu0 0.0
    %193 = vmatpush1.msra.mxu0 0.0
    %194 = vmatprep.subr.mxu0 0.0
    %195 = vmatpush1.msra.mxu0 0.0
    %196 = vmatprep.subr.mxu0 0.0
    %197 = vmatpush1.msra.mxu0 0.0
    %198 = vmatprep.subr.mxu0 0.0
    %199 = vmatpush1.msra.mxu0 0.0
    %200 = vmatprep.subr.mxu0 0.0
    %201 = vmatpush1.msra.mxu0 0.0
    %202 = vmatprep.subr.mxu0 0.0
    %203 = vmatpush1.msra.mxu0 0.0
    %204 = vmatprep.subr.mxu0 0.0
    %205 = vmatpush1.msra.mxu0 0.0
    %206 = vmatprep.subr.mxu0 0.0
    %207 = vmatpush1.msra.mxu0 0.0
    %208 = vmatprep.subr.mxu0 0.0
    %209 = vmatpush1.msra.mxu0 0.0
    %210 = vmatprep.subr.mxu0 0.0
    %211 = vmatpush1.msra.mxu0 0.0
    %212 = vmatprep.mubr.f32.mxu0 0.0
    %213 = vmatmul.mubr.f32.gmra.mrb[0].mxu0 %v143
    %v214 = vpop.f32.mrb[0].mxu0
    %v215 = vadd.f32 %v133, %v214
    %v216 = vpop.f32.mrb[0].mxu0
    %217 = vmatprep.mubr.f32.mxu0 0.0
    %218 = vmatmul.mubr.f32.gmra.mrb[0].mxu0 %v146
    %v219 = vpop.f32.mrb[0].mxu0
    %v220 = vadd.f32 %v138, %v219
    %v221 = vpop.f32.mrb[0].mxu0
    %222 = vdwg.mxu0
    %v223 = vlaneseq
    %v224 = vshrl.u32 %v223, 7
    %v225 = vsub.s32 0, %v224
    %v226 = vrot.slane %v58, %v225
    %v227 = vadd.f32 %v215, %v226
    %v228 = vadd.f32 %v220, %v226
    %vm229 = vcmask 523264
    %v230 = vsel %vm229, %v227, 0.0
    %231 = vadd.xlane.f32.xlu0 %v230
    %v232 = vpop.xlane.xlu0 %231
    %v233 = vsel %vm229, %v228, 0.0
    %234 = vadd.xlane.f32.xlu0 %v233
    %v235 = vpop.xlane.xlu0 %234
    %v236 = vrcp.pop 64.0
    %v237 = vmul.f32 %v232, %v236
    %v238 = vmul.f32 %v235, %v236
    %v239 = vsub.f32 %v227, %v237
    %v240 = vsub.f32 %v228, %v238
    %v241 = vmul.f32 %v239, %v239
    %v242 = vmul.f32 %v240, %v240
    %v243 = vsel %vm229, %v241, 0.0
    %244 = vadd.xlane.f32.xlu0 %v243
    %v245 = vpop.xlane.xlu0 %244
    %v246 = vsel %vm229, %v242, 0.0
    %247 = vadd.xlane.f32.xlu0 %v246
    %v248 = vpop.xlane.xlu0 %247
    %v249 = vmul.f32 %v245, %v236
    %v250 = vmul.f32 %v248, %v236
    %v251 = vadd.f32 %v249, 1e-05
    %v252 = vadd.f32 %v250, 1e-05
    %v253 = vrsqrt.pop %v251
    %v254 = vrsqrt.pop %v252
    %v255 = vmul.f32 %v239, %v253
    %v256 = vmul.f32 %v240, %v254
    %v257 = vlaneseq
    %v258 = vshrl.u32 %v257, 7
    %v259 = vsub.s32 1, %v258
    %v260 = vrot.slane %v58, %v259
    %v261 = vmul.f32 %v255, %v260
    %v262 = vmul.f32 %v256, %v260
    %v263 = vlaneseq
    %v264 = vshrl.u32 %v263, 7
    %v265 = vsub.s32 2, %v264
    %v266 = vrot.slane %v58, %v265
    %v267 = vadd.f32 %v261, %v266
    %v268 = vadd.f32 %v262, %v266
    %v269 = vmax.f32 %v267, 0.0
    %v270 = vmax.f32 %v268, 0.0
    %v271 = vld [vmem:[#allocation5 + $0x38] sm:$0xff]
    %v272 = vld [vmem:[#allocation5 + $0x40] sm:$0xff]
    %v273 = vld [vmem:[#allocation5 + $0x48] sm:$0xff]
    %v274 = vld [vmem:[#allocation5 + $0x50] sm:$0xff]
    %v275 = vld [vmem:[#allocation5 + $0x58] sm:$0xff]
    %v276 = vld [vmem:[#allocation5 + $0x60] sm:$0xff]
    %v277 = vld [vmem:[#allocation5 + $0x68] sm:$0xff]
    %v278 = vld [vmem:[#allocation5 + $0x70] sm:$0xff]
    %v279 = vld [vmem:[#allocation5 + $0x78] sm:$0x7]
    %v280 = vlaneseq
    %v281 = vshrl.u32 %v280, 7
    %v282 = vsub.s32 0, %v281
    %v283 = vrot.slane %v279, %v282
    %v285 = vsel %vm229, %v269, 0
    %v288 = vsel %vm229, %v270, 0
    %290 = vmatprep.subr.mxu0 0.0
    %291 = vmatpush1.msra.mxu0 %v271
    %292 = vmatprep.subr.mxu0 0.0
    %293 = vmatpush1.msra.mxu0 %v272
    %294 = vmatprep.subr.mxu0 0.0
    %295 = vmatpush1.msra.mxu0 %v273
    %296 = vmatprep.subr.mxu0 0.0
    %297 = vmatpush1.msra.mxu0 %v274
    %298 = vmatprep.subr.mxu0 0.0
    %299 = vmatpush1.msra.mxu0 %v275
    %300 = vmatprep.subr.mxu0 0.0
    %301 = vmatpush1.msra.mxu0 %v276
    %302 = vmatprep.subr.mxu0 0.0
    %303 = vmatpush1.msra.mxu0 %v277
    %304 = vmatprep.subr.mxu0 0.0
    %305 = vmatpush1.msra.mxu0 %v278
    %306 = vmatprep.subr.mxu0 0.0
    %307 = vmatpush1.msra.mxu0 0.0
    %308 = vmatprep.subr.mxu0 0.0
    %309 = vmatpush1.msra.mxu0 0.0
    %310 = vmatprep.subr.mxu0 0.0
    %311 = vmatpush1.msra.mxu0 0.0
    %312 = vmatprep.subr.mxu0 0.0
    %313 = vmatpush1.msra.mxu0 0.0
    %314 = vmatprep.subr.mxu0 0.0
    %315 = vmatpush1.msra.mxu0 0.0
    %316 = vmatprep.subr.mxu0 0.0
    %317 = vmatpush1.msra.mxu0 0.0
    %318 = vmatprep.subr.mxu0 0.0
    %319 = vmatpush1.msra.mxu0 0.0
    %320 = vmatprep.subr.mxu0 0.0
    %321 = vmatpush1.msra.mxu0 0.0
    %322 = vmatprep.subr.mxu0 0.0
    %323 = vmatpush1.msra.mxu0 0.0
    %324 = vmatprep.subr.mxu0 0.0
    %325 = vmatpush1.msra.mxu0 0.0
    %326 = vmatprep.subr.mxu0 0.0
    %327 = vmatpush1.msra.mxu0 0.0
    %328 = vmatprep.subr.mxu0 0.0
    %329 = vmatpush1.msra.mxu0 0.0
    %330 = vmatprep.subr.mxu0 0.0
    %331 = vmatpush1.msra.mxu0 0.0
    %332 = vmatprep.subr.mxu0 0.0
    %333 = vmatpush1.msra.mxu0 0.0
    %334 = vmatprep.subr.mxu0 0.0
    %335 = vmatpush1.msra.mxu0 0.0
    %336 = vmatprep.subr.mxu0 0.0
    %337 = vmatpush1.msra.mxu0 0.0
    %338 = vmatprep.subr.mxu0 0.0
    %339 = vmatpush1.msra.mxu0 0.0
    %340 = vmatprep.subr.mxu0 0.0
    %341 = vmatpush1.msra.mxu0 0.0
    %342 = vmatprep.subr.mxu0 0.0
    %343 = vmatpush1.msra.mxu0 0.0
    %344 = vmatprep.subr.mxu0 0.0
    %345 = vmatpush1.msra.mxu0 0.0
    %346 = vmatprep.subr.mxu0 0.0
    %347 = vmatpush1.msra.mxu0 0.0
    %348 = vmatprep.subr.mxu0 0.0
    %349 = vmatpush1.msra.mxu0 0.0
    %350 = vmatprep.subr.mxu0 0.0
    %351 = vmatpush1.msra.mxu0 0.0
    %352 = vmatprep.subr.mxu0 0.0
    %353 = vmatpush1.msra.mxu0 0.0
    %354 = vmatprep.mubr.f32.mxu0 0.0
    %355 = vmatmul.mubr.f32.gmra.mrb[0].mxu0 %v285
    %v356 = vpop.f32.mrb[0].mxu0
    %v357 = vadd.f32 %v283, %v356
    %v358 = vpop.f32.mrb[0].mxu0
    %359 = vmatprep.mubr.f32.mxu0 0.0
    %360 = vmatmul.mubr.f32.gmra.mrb[0].mxu0 %v288
    %v361 = vpop.f32.mrb[0].mxu0
    %v362 = vadd.f32 %v283, %v361
    %v363 = vpop.f32.mrb[0].mxu0
    %364 = vdwg.mxu0
    %v365 = vsel %vm141, %v357, 0.0
    %366 = vadd.xlane.f32.xlu0 %v365
    %v367 = vpop.xlane.xlu0 %366
    %v368 = vsel %vm141, %v362, 0.0
    %369 = vadd.xlane.f32.xlu0 %v368
    %v370 = vpop.xlane.xlu0 %369
    %v371 = vrcp.pop 32.0
    %v372 = vmul.f32 %v367, %v371
    %v373 = vmul.f32 %v370, %v371
    %v374 = vsub.f32 %v357, %v372
    %v375 = vsub.f32 %v362, %v373
    %v376 = vmul.f32 %v374, %v374
    %v377 = vmul.f32 %v375, %v375
    %v378 = vsel %vm141, %v376, 0.0
    %379 = vadd.xlane.f32.xlu0 %v378
    %v380 = vpop.xlane.xlu0 %379
    %v381 = vsel %vm141, %v377, 0.0
    %382 = vadd.xlane.f32.xlu0 %v381
    %v383 = vpop.xlane.xlu0 %382
    %v384 = vmul.f32 %v380, %v371
    %v385 = vmul.f32 %v383, %v371
    %v386 = vadd.f32 %v384, 1e-05
    %v387 = vadd.f32 %v385, 1e-05
    %v388 = vrsqrt.pop %v386
    %v389 = vrsqrt.pop %v387
    %v390 = vmul.f32 %v374, %v388
    %v391 = vmul.f32 %v375, %v389
    %v392 = vlaneseq
    %v393 = vshrl.u32 %v392, 7
    %v394 = vsub.s32 1, %v393
    %v395 = vrot.slane %v279, %v394
    %v396 = vmul.f32 %v390, %v395
    %v397 = vmul.f32 %v391, %v395
    %v398 = vlaneseq
    %v399 = vshrl.u32 %v398, 7
    %v400 = vsub.s32 2, %v399
    %v401 = vrot.slane %v279, %v400
    %v402 = vadd.f32 %v396, %v401
    %v403 = vadd.f32 %v397, %v401
    %v404 = vmax.f32 %v402, 0.0
    %v405 = vmax.f32 %v403, 0.0
    %v406 = vld [vmem:[#allocation5 + $0x80] sm:$0xff]
    %v407 = vld [vmem:[#allocation5 + $0x88] sm:$0xff]
    %v408 = vld [vmem:[#allocation5 + $0x90] sm:$0xff]
    %v409 = vld [vmem:[#allocation5 + $0x98] sm:$0xff]
    %v410 = vld [vmem:[#allocation5 + $0xa0] sm:$0x1]
    %v411 = vlaneseq
    %v412 = vshrl.u32 %v411, 7
    %v413 = vsub.s32 0, %v412
    %v414 = vrot.slane %v410, %v413
    %v416 = vsel %vm141, %v404, 0
    %v419 = vsel %vm141, %v405, 0
    %421 = vmatprep.subr.mxu0 0.0
    %422 = vmatpush1.msra.mxu0 %v406
    %423 = vmatprep.subr.mxu0 0.0
    %424 = vmatpush1.msra.mxu0 %v407
    %425 = vmatprep.subr.mxu0 0.0
    %426 = vmatpush1.msra.mxu0 %v408
    %427 = vmatprep.subr.mxu0 0.0
    %428 = vmatpush1.msra.mxu0 %v409
    %429 = vmatprep.subr.mxu0 0.0
    %430 = vmatpush1.msra.mxu0 0.0
    %431 = vmatprep.subr.mxu0 0.0
    %432 = vmatpush1.msra.mxu0 0.0
    %433 = vmatprep.subr.mxu0 0.0
    %434 = vmatpush1.msra.mxu0 0.0
    %435 = vmatprep.subr.mxu0 0.0
    %436 = vmatpush1.msra.mxu0 0.0
    %437 = vmatprep.subr.mxu0 0.0
    %438 = vmatpush1.msra.mxu0 0.0
    %439 = vmatprep.subr.mxu0 0.0
    %440 = vmatpush1.msra.mxu0 0.0
    %441 = vmatprep.subr.mxu0 0.0
    %442 = vmatpush1.msra.mxu0 0.0
    %443 = vmatprep.subr.mxu0 0.0
    %444 = vmatpush1.msra.mxu0 0.0
    %445 = vmatprep.subr.mxu0 0.0
    %446 = vmatpush1.msra.mxu0 0.0
    %447 = vmatprep.subr.mxu0 0.0
    %448 = vmatpush1.msra.mxu0 0.0
    %449 = vmatprep.subr.mxu0 0.0
    %450 = vmatpush1.msra.mxu0 0.0
    %451 = vmatprep.subr.mxu0 0.0
    %452 = vmatpush1.msra.mxu0 0.0
    %453 = vmatprep.subr.mxu0 0.0
    %454 = vmatpush1.msra.mxu0 0.0
    %455 = vmatprep.subr.mxu0 0.0
    %456 = vmatpush1.msra.mxu0 0.0
    %457 = vmatprep.subr.mxu0 0.0
    %458 = vmatpush1.msra.mxu0 0.0
    %459 = vmatprep.subr.mxu0 0.0
    %460 = vmatpush1.msra.mxu0 0.0
    %461 = vmatprep.subr.mxu0 0.0
    %462 = vmatpush1.msra.mxu0 0.0
    %463 = vmatprep.subr.mxu0 0.0
    %464 = vmatpush1.msra.mxu0 0.0
    %465 = vmatprep.subr.mxu0 0.0
    %466 = vmatpush1.msra.mxu0 0.0
    %467 = vmatprep.subr.mxu0 0.0
    %468 = vmatpush1.msra.mxu0 0.0
    %469 = vmatprep.subr.mxu0 0.0
    %470 = vmatpush1.msra.mxu0 0.0
    %471 = vmatprep.subr.mxu0 0.0
    %472 = vmatpush1.msra.mxu0 0.0
    %473 = vmatprep.subr.mxu0 0.0
    %474 = vmatpush1.msra.mxu0 0.0
    %475 = vmatprep.subr.mxu0 0.0
    %476 = vmatpush1.msra.mxu0 0.0
    %477 = vmatprep.subr.mxu0 0.0
    %478 = vmatpush1.msra.mxu0 0.0
    %479 = vmatprep.subr.mxu0 0.0
    %480 = vmatpush1.msra.mxu0 0.0
    %481 = vmatprep.subr.mxu0 0.0
    %482 = vmatpush1.msra.mxu0 0.0
    %483 = vmatprep.subr.mxu0 0.0
    %484 = vmatpush1.msra.mxu0 0.0
    %485 = vmatprep.mubr.f32.mxu0 0.0
    %486 = vmatmul.mubr.f32.gmra.mrb[0].mxu0 %v416
    %v487 = vpop.f32.mrb[0].mxu0
    %v488 = vadd.f32 %v414, %v487
    %v489 = vpop.f32.mrb[0].mxu0
    %490 = vmatprep.mubr.f32.mxu0 0.0
    %491 = vmatmul.mubr.f32.gmra.mrb[0].mxu0 %v419
    %v492 = vpop.f32.mrb[0].mxu0
    %v493 = vadd.f32 %v414, %v492
    %v494 = vpop.f32.mrb[0].mxu0
    %495 = vdwg.mxu0
    %v496 = vmul.f32 %v488, 0.5
    %v497 = vmul.f32 %v493, 0.5
    %v498 = vmul.f32 %v496, 1.442695
    %v499 = vpow.pop %v498
    %v500 = vmul.f32 %v497, 1.442695
    %v501 = vpow.pop %v500
    %504 = vrot.lane.b32.xlu0 %v499, 120
    %v505 = vpop.permute.xlu0 %504
    %506 = vrot.lane.b32.xlu0 %v501, 120
    %v507 = vpop.permute.xlu0 %506
    %v510 = vmul.f32 %v50, %v505
    %v511 = vmul.f32 %v51, %v507
    %v512 = vadd.f32 %v510, %v488
    %v513 = vadd.f32 %v511, %v493
    %v514 = vld [vmem:[#allocation5 + $0xa8] sm:$0xff]
    %v515 = vld [vmem:[#allocation5 + $0xb0] sm:$0xff]
    %v516 = vld [vmem:[#allocation5 + $0xb8] sm:$0xff]
    %v517 = vld [vmem:[#allocation5 + $0xc0] sm:$0x7]
    %518 = vmatprep.subr.mxu0 0.0
    %519 = vmatpush1.msra.mxu0 %v515
    %520 = vmatprep.subr.mxu0 0.0
    %521 = vmatpush1.msra.mxu0 %v516
    %522 = vmatprep.subr.mxu0 0.0
    %523 = vmatpush1.msra.mxu0 0.0
    %524 = vmatprep.subr.mxu0 0.0
    %525 = vmatpush1.msra.mxu0 0.0
    %526 = vmatprep.subr.mxu0 0.0
    %527 = vmatpush1.msra.mxu0 0.0
    %528 = vmatprep.subr.mxu0 0.0
    %529 = vmatpush1.msra.mxu0 0.0
    %530 = vmatprep.subr.mxu0 0.0
    %531 = vmatpush1.msra.mxu0 0.0
    %532 = vmatprep.subr.mxu0 0.0
    %533 = vmatpush1.msra.mxu0 0.0
    %534 = vmatprep.subr.mxu0 0.0
    %535 = vmatpush1.msra.mxu0 0.0
    %536 = vmatprep.subr.mxu0 0.0
    %537 = vmatpush1.msra.mxu0 0.0
    %538 = vmatprep.subr.mxu0 0.0
    %539 = vmatpush1.msra.mxu0 0.0
    %540 = vmatprep.subr.mxu0 0.0
    %541 = vmatpush1.msra.mxu0 0.0
    %542 = vmatprep.subr.mxu0 0.0
    %543 = vmatpush1.msra.mxu0 0.0
    %544 = vmatprep.subr.mxu0 0.0
    %545 = vmatpush1.msra.mxu0 0.0
    %546 = vmatprep.subr.mxu0 0.0
    %547 = vmatpush1.msra.mxu0 0.0
    %548 = vmatprep.subr.mxu0 0.0
    %549 = vmatpush1.msra.mxu0 0.0
    %550 = vmatprep.subr.mxu0 0.0
    %551 = vmatpush1.msra.mxu0 0.0
    %552 = vmatprep.subr.mxu0 0.0
    %553 = vmatpush1.msra.mxu0 0.0
    %554 = vmatprep.subr.mxu0 0.0
    %555 = vmatpush1.msra.mxu0 0.0
    %556 = vmatprep.subr.mxu0 0.0
    %557 = vmatpush1.msra.mxu0 0.0
    %558 = vmatprep.subr.mxu0 0.0
    %559 = vmatpush1.msra.mxu0 0.0
    %560 = vmatprep.subr.mxu0 0.0
    %561 = vmatpush1.msra.mxu0 0.0
    %562 = vmatprep.subr.mxu0 0.0
    %563 = vmatpush1.msra.mxu0 0.0
    %564 = vmatprep.subr.mxu0 0.0
    %565 = vmatpush1.msra.mxu0 0.0
    %566 = vmatprep.subr.mxu0 0.0
    %567 = vmatpush1.msra.mxu0 0.0
    %568 = vmatprep.subr.mxu0 0.0
    %569 = vmatpush1.msra.mxu0 0.0
    %570 = vmatprep.subr.mxu0 0.0
    %571 = vmatpush1.msra.mxu0 0.0
    %572 = vmatprep.subr.mxu0 0.0
    %573 = vmatpush1.msra.mxu0 0.0
    %574 = vmatprep.subr.mxu0 0.0
    %575 = vmatpush1.msra.mxu0 0.0
    %576 = vmatprep.subr.mxu0 0.0
    %577 = vmatpush1.msra.mxu0 0.0
    %578 = vmatprep.subr.mxu0 0.0
    %579 = vmatpush1.msra.mxu0 0.0
    %580 = vmatprep.subr.mxu0 0.0
    %581 = vmatpush1.msra.mxu0 0.0
    %582 = vmatprep.mubr.f32.mxu0 0.0
    %583 = vmatmul.mubr.f32.gmra.mrb[0].mxu0 %v61
    %v584 = vpop.f32.mrb[0].mxu0
    %v585 = vadd.f32 0.0, %v584
    %v586 = vpop.f32.mrb[0].mxu0
    %587 = vmatprep.mubr.f32.mxu0 0.0
    %588 = vmatmul.mubr.f32.gmra.mrb[0].mxu0 %v64
    %v589 = vpop.f32.mrb[0].mxu0
    %v590 = vadd.f32 0.0, %v589
    %v591 = vpop.f32.mrb[0].mxu0
    %592 = vdwg.mxu0
    %vm593 = vcmask 64512
    %v595 = vsel %vm593, %v512, 0
    %v598 = vsel %vm593, %v513, 0
    %600 = vmatprep.subr.mxu0 0.0
    %601 = vmatpush1.msra.mxu0 %v514
    %602 = vmatprep.subr.mxu0 0.0
    %603 = vmatpush1.msra.mxu0 0.0
    %604 = vmatprep.subr.mxu0 0.0
    %605 = vmatpush1.msra.mxu0 0.0
    %606 = vmatprep.subr.mxu0 0.0
    %607 = vmatpush1.msra.mxu0 0.0
    %608 = vmatprep.subr.mxu0 0.0
    %609 = vmatpush1.msra.mxu0 0.0
    %610 = vmatprep.subr.mxu0 0.0
    %611 = vmatpush1.msra.mxu0 0.0
    %612 = vmatprep.subr.mxu0 0.0
    %613 = vmatpush1.msra.mxu0 0.0
    %614 = vmatprep.subr.mxu0 0.0
    %615 = vmatpush1.msra.mxu0 0.0
    %616 = vmatprep.subr.mxu0 0.0
    %617 = vmatpush1.msra.mxu0 0.0
    %618 = vmatprep.subr.mxu0 0.0
    %619 = vmatpush1.msra.mxu0 0.0
    %620 = vmatprep.subr.mxu0 0.0
    %621 = vmatpush1.msra.mxu0 0.0
    %622 = vmatprep.subr.mxu0 0.0
    %623 = vmatpush1.msra.mxu0 0.0
    %624 = vmatprep.subr.mxu0 0.0
    %625 = vmatpush1.msra.mxu0 0.0
    %626 = vmatprep.subr.mxu0 0.0
    %627 = vmatpush1.msra.mxu0 0.0
    %628 = vmatprep.subr.mxu0 0.0
    %629 = vmatpush1.msra.mxu0 0.0
    %630 = vmatprep.subr.mxu0 0.0
    %631 = vmatpush1.msra.mxu0 0.0
    %632 = vmatprep.subr.mxu0 0.0
    %633 = vmatpush1.msra.mxu0 0.0
    %634 = vmatprep.subr.mxu0 0.0
    %635 = vmatpush1.msra.mxu0 0.0
    %636 = vmatprep.subr.mxu0 0.0
    %637 = vmatpush1.msra.mxu0 0.0
    %638 = vmatprep.subr.mxu0 0.0
    %639 = vmatpush1.msra.mxu0 0.0
    %640 = vmatprep.subr.mxu0 0.0
    %641 = vmatpush1.msra.mxu0 0.0
    %642 = vmatprep.subr.mxu0 0.0
    %643 = vmatpush1.msra.mxu0 0.0
    %644 = vmatprep.subr.mxu0 0.0
    %645 = vmatpush1.msra.mxu0 0.0
    %646 = vmatprep.subr.mxu0 0.0
    %647 = vmatpush1.msra.mxu0 0.0
    %648 = vmatprep.subr.mxu0 0.0
    %649 = vmatpush1.msra.mxu0 0.0
    %650 = vmatprep.subr.mxu0 0.0
    %651 = vmatpush1.msra.mxu0 0.0
    %652 = vmatprep.subr.mxu0 0.0
    %653 = vmatpush1.msra.mxu0 0.0
    %654 = vmatprep.subr.mxu0 0.0
    %655 = vmatpush1.msra.mxu0 0.0
    %656 = vmatprep.subr.mxu0 0.0
    %657 = vmatpush1.msra.mxu0 0.0
    %658 = vmatprep.subr.mxu0 0.0
    %659 = vmatpush1.msra.mxu0 0.0
    %660 = vmatprep.subr.mxu0 0.0
    %661 = vmatpush1.msra.mxu0 0.0
    %662 = vmatprep.subr.mxu0 0.0
    %663 = vmatpush1.msra.mxu0 0.0
    %664 = vmatprep.mubr.f32.mxu0 0.0
    %665 = vmatmul.mubr.f32.gmra.mrb[0].mxu0 %v595
    %v666 = vpop.f32.mrb[0].mxu0
    %v667 = vadd.f32 %v585, %v666
    %v668 = vpop.f32.mrb[0].mxu0
    %669 = vmatprep.mubr.f32.mxu0 0.0
    %670 = vmatmul.mubr.f32.gmra.mrb[0].mxu0 %v598
    %v671 = vpop.f32.mrb[0].mxu0
    %v672 = vadd.f32 %v590, %v671
    %v673 = vpop.f32.mrb[0].mxu0
    %674 = vdwg.mxu0
    %v675 = vlaneseq
    %v676 = vshrl.u32 %v675, 7
    %v677 = vsub.s32 0, %v676
    %v678 = vrot.slane %v517, %v677
    %v679 = vadd.f32 %v667, %v678
    %v680 = vadd.f32 %v672, %v678
    %v681 = vsel %vm141, %v679, 0.0
    %682 = vadd.xlane.f32.xlu0 %v681
    %v683 = vpop.xlane.xlu0 %682
    %v684 = vsel %vm141, %v680, 0.0
    %685 = vadd.xlane.f32.xlu0 %v684
    %v686 = vpop.xlane.xlu0 %685
    %v687 = vmul.f32 %v683, %v371
    %v688 = vmul.f32 %v686, %v371
    %v689 = vsub.f32 %v679, %v687
    %v690 = vsub.f32 %v680, %v688
    %v691 = vmul.f32 %v689, %v689
    %v692 = vmul.f32 %v690, %v690
    %v693 = vsel %vm141, %v691, 0.0
    %694 = vadd.xlane.f32.xlu0 %v693
    %v695 = vpop.xlane.xlu0 %694
    %v696 = vsel %vm141, %v692, 0.0
    %697 = vadd.xlane.f32.xlu0 %v696
    %v698 = vpop.xlane.xlu0 %697
    %v699 = vmul.f32 %v695, %v371
    %v700 = vmul.f32 %v698, %v371
    %v701 = vadd.f32 %v699, 1e-05
    %v702 = vadd.f32 %v700, 1e-05
    %v703 = vrsqrt.pop %v701
    %v704 = vrsqrt.pop %v702
    %v705 = vmul.f32 %v689, %v703
    %v706 = vmul.f32 %v690, %v704
    %v707 = vlaneseq
    %v708 = vshrl.u32 %v707, 7
    %v709 = vsub.s32 1, %v708
    %v710 = vrot.slane %v517, %v709
    %v711 = vmul.f32 %v705, %v710
    %v712 = vmul.f32 %v706, %v710
    %v713 = vlaneseq
    %v714 = vshrl.u32 %v713, 7
    %v715 = vsub.s32 2, %v714
    %v716 = vrot.slane %v517, %v715
    %v717 = vadd.f32 %v711, %v716
    %v718 = vadd.f32 %v712, %v716
    %v719 = vmax.f32 %v717, 0.0
    %v720 = vmax.f32 %v718, 0.0
    %v721 = vld [vmem:[#allocation5 + $0xc8] sm:$0xff]
    %v722 = vld [vmem:[#allocation5 + $0xd0] sm:$0xff]
    %v723 = vld [vmem:[#allocation5 + $0xd8] sm:$0xff]
    %v724 = vld [vmem:[#allocation5 + $0xe0] sm:$0xff]
    %v725 = vld [vmem:[#allocation5 + $0xe8] sm:$0x7]
    %v726 = vlaneseq
    %v727 = vshrl.u32 %v726, 7
    %v728 = vsub.s32 0, %v727
    %v729 = vrot.slane %v725, %v728
    %v731 = vsel %vm141, %v719, 0
    %v734 = vsel %vm141, %v720, 0
    %736 = vmatprep.subr.mxu0 0.0
    %737 = vmatpush1.msra.mxu0 %v721
    %738 = vmatprep.subr.mxu0 0.0
    %739 = vmatpush1.msra.mxu0 %v722
    %740 = vmatprep.subr.mxu0 0.0
    %741 = vmatpush1.msra.mxu0 %v723
    %742 = vmatprep.subr.mxu0 0.0
    %743 = vmatpush1.msra.mxu0 %v724
    %744 = vmatprep.subr.mxu0 0.0
    %745 = vmatpush1.msra.mxu0 0.0
    %746 = vmatprep.subr.mxu0 0.0
    %747 = vmatpush1.msra.mxu0 0.0
    %748 = vmatprep.subr.mxu0 0.0
    %749 = vmatpush1.msra.mxu0 0.0
    %750 = vmatprep.subr.mxu0 0.0
    %751 = vmatpush1.msra.mxu0 0.0
    %752 = vmatprep.subr.mxu0 0.0
    %753 = vmatpush1.msra.mxu0 0.0
    %754 = vmatprep.subr.mxu0 0.0
    %755 = vmatpush1.msra.mxu0 0.0
    %756 = vmatprep.subr.mxu0 0.0
    %757 = vmatpush1.msra.mxu0 0.0
    %758 = vmatprep.subr.mxu0 0.0
    %759 = vmatpush1.msra.mxu0 0.0
    %760 = vmatprep.subr.mxu0 0.0
    %761 = vmatpush1.msra.mxu0 0.0
    %762 = vmatprep.subr.mxu0 0.0
    %763 = vmatpush1.msra.mxu0 0.0
    %764 = vmatprep.subr.mxu0 0.0
    %765 = vmatpush1.msra.mxu0 0.0
    %766 = vmatprep.subr.mxu0 0.0
    %767 = vmatpush1.msra.mxu0 0.0
    %768 = vmatprep.subr.mxu0 0.0
    %769 = vmatpush1.msra.mxu0 0.0
    %770 = vmatprep.subr.mxu0 0.0
    %771 = vmatpush1.msra.mxu0 0.0
    %772 = vmatprep.subr.mxu0 0.0
    %773 = vmatpush1.msra.mxu0 0.0
    %774 = vmatprep.subr.mxu0 0.0
    %775 = vmatpush1.msra.mxu0 0.0
    %776 = vmatprep.subr.mxu0 0.0
    %777 = vmatpush1.msra.mxu0 0.0
    %778 = vmatprep.subr.mxu0 0.0
    %779 = vmatpush1.msra.mxu0 0.0
    %780 = vmatprep.subr.mxu0 0.0
    %781 = vmatpush1.msra.mxu0 0.0
    %782 = vmatprep.subr.mxu0 0.0
    %783 = vmatpush1.msra.mxu0 0.0
    %784 = vmatprep.subr.mxu0 0.0
    %785 = vmatpush1.msra.mxu0 0.0
    %786 = vmatprep.subr.mxu0 0.0
    %787 = vmatpush1.msra.mxu0 0.0
    %788 = vmatprep.subr.mxu0 0.0
    %789 = vmatpush1.msra.mxu0 0.0
    %790 = vmatprep.subr.mxu0 0.0
    %791 = vmatpush1.msra.mxu0 0.0
    %792 = vmatprep.subr.mxu0 0.0
    %793 = vmatpush1.msra.mxu0 0.0
    %794 = vmatprep.subr.mxu0 0.0
    %795 = vmatpush1.msra.mxu0 0.0
    %796 = vmatprep.subr.mxu0 0.0
    %797 = vmatpush1.msra.mxu0 0.0
    %798 = vmatprep.subr.mxu0 0.0
    %799 = vmatpush1.msra.mxu0 0.0
    %800 = vmatprep.mubr.f32.mxu0 0.0
    %801 = vmatmul.mubr.f32.gmra.mrb[0].mxu0 %v731
    %v802 = vpop.f32.mrb[0].mxu0
    %v803 = vadd.f32 %v729, %v802
    %v804 = vpop.f32.mrb[0].mxu0
    %805 = vmatprep.mubr.f32.mxu0 0.0
    %806 = vmatmul.mubr.f32.gmra.mrb[0].mxu0 %v734
    %v807 = vpop.f32.mrb[0].mxu0
    %v808 = vadd.f32 %v729, %v807
    %v809 = vpop.f32.mrb[0].mxu0
    %810 = vdwg.mxu0
    %v811 = vsel %vm229, %v803, 0.0
    %812 = vadd.xlane.f32.xlu0 %v811
    %v813 = vpop.xlane.xlu0 %812
    %v814 = vsel %vm229, %v808, 0.0
    %815 = vadd.xlane.f32.xlu0 %v814
    %v816 = vpop.xlane.xlu0 %815
    %v817 = vmul.f32 %v813, %v236
    %v818 = vmul.f32 %v816, %v236
    %v819 = vsub.f32 %v803, %v817
    %v820 = vsub.f32 %v808, %v818
    %v821 = vmul.f32 %v819, %v819
    %v822 = vmul.f32 %v820, %v820
    %v823 = vsel %vm229, %v821, 0.0
    %824 = vadd.xlane.f32.xlu0 %v823
    %v825 = vpop.xlane.xlu0 %824
    %v826 = vsel %vm229, %v822, 0.0
    %827 = vadd.xlane.f32.xlu0 %v826
    %v828 = vpop.xlane.xlu0 %827
    %v829 = vmul.f32 %v825, %v236
    %v830 = vmul.f32 %v828, %v236
    %v831 = vadd.f32 %v829, 1e-05
    %v832 = vadd.f32 %v830, 1e-05
    %v833 = vrsqrt.pop %v831
    %v834 = vrsqrt.pop %v832
    %v835 = vmul.f32 %v819, %v833
    %v836 = vmul.f32 %v820, %v834
    %v837 = vlaneseq
    %v838 = vshrl.u32 %v837, 7
    %v839 = vsub.s32 1, %v838
    %v840 = vrot.slane %v725, %v839
    %v841 = vmul.f32 %v835, %v840
    %v842 = vmul.f32 %v836, %v840
    %v843 = vlaneseq
    %v844 = vshrl.u32 %v843, 7
    %v845 = vsub.s32 2, %v844
    %v846 = vrot.slane %v725, %v845
    %v847 = vadd.f32 %v841, %v846
    %v848 = vadd.f32 %v842, %v846
    %v849 = vmax.f32 %v847, 0.0
    %v850 = vmax.f32 %v848, 0.0
    %v851 = vld [vmem:[#allocation5 + $0xf0] sm:$0xff]
    %v852 = vld [vmem:[#allocation5 + $0xf8] sm:$0xff]
    %v853 = vld [vmem:[#allocation5 + $0x100] sm:$0xff]
    %v854 = vld [vmem:[#allocation5 + $0x108] sm:$0xff]
    %v855 = vld [vmem:[#allocation5 + $0x110] sm:$0xff]
    %v856 = vld [vmem:[#allocation5 + $0x118] sm:$0xff]
    %v857 = vld [vmem:[#allocation5 + $0x120] sm:$0xff]
    %v858 = vld [vmem:[#allocation5 + $0x128] sm:$0xff]
    %v859 = vld [vmem:[#allocation5 + $0x130] sm:$0x1]
    %v860 = vlaneseq
    %v861 = vshrl.u32 %v860, 7
    %v862 = vsub.s32 0, %v861
    %v863 = vrot.slane %v859, %v862
    %v865 = vsel %vm229, %v849, 0
    %v868 = vsel %vm229, %v850, 0
    %870 = vmatprep.subr.mxu0 0.0
    %871 = vmatpush1.msra.mxu0 %v851
    %872 = vmatprep.subr.mxu0 0.0
    %873 = vmatpush1.msra.mxu0 %v852
    %874 = vmatprep.subr.mxu0 0.0
    %875 = vmatpush1.msra.mxu0 %v853
    %876 = vmatprep.subr.mxu0 0.0
    %877 = vmatpush1.msra.mxu0 %v854
    %878 = vmatprep.subr.mxu0 0.0
    %879 = vmatpush1.msra.mxu0 %v855
    %880 = vmatprep.subr.mxu0 0.0
    %881 = vmatpush1.msra.mxu0 %v856
    %882 = vmatprep.subr.mxu0 0.0
    %883 = vmatpush1.msra.mxu0 %v857
    %884 = vmatprep.subr.mxu0 0.0
    %885 = vmatpush1.msra.mxu0 %v858
    %886 = vmatprep.subr.mxu0 0.0
    %887 = vmatpush1.msra.mxu0 0.0
    %888 = vmatprep.subr.mxu0 0.0
    %889 = vmatpush1.msra.mxu0 0.0
    %890 = vmatprep.subr.mxu0 0.0
    %891 = vmatpush1.msra.mxu0 0.0
    %892 = vmatprep.subr.mxu0 0.0
    %893 = vmatpush1.msra.mxu0 0.0
    %894 = vmatprep.subr.mxu0 0.0
    %895 = vmatpush1.msra.mxu0 0.0
    %896 = vmatprep.subr.mxu0 0.0
    %897 = vmatpush1.msra.mxu0 0.0
    %898 = vmatprep.subr.mxu0 0.0
    %899 = vmatpush1.msra.mxu0 0.0
    %900 = vmatprep.subr.mxu0 0.0
    %901 = vmatpush1.msra.mxu0 0.0
    %902 = vmatprep.subr.mxu0 0.0
    %903 = vmatpush1.msra.mxu0 0.0
    %904 = vmatprep.subr.mxu0 0.0
    %905 = vmatpush1.msra.mxu0 0.0
    %906 = vmatprep.subr.mxu0 0.0
    %907 = vmatpush1.msra.mxu0 0.0
    %908 = vmatprep.subr.mxu0 0.0
    %909 = vmatpush1.msra.mxu0 0.0
    %910 = vmatprep.subr.mxu0 0.0
    %911 = vmatpush1.msra.mxu0 0.0
    %912 = vmatprep.subr.mxu0 0.0
    %913 = vmatpush1.msra.mxu0 0.0
    %914 = vmatprep.subr.mxu0 0.0
    %915 = vmatpush1.msra.mxu0 0.0
    %916 = vmatprep.subr.mxu0 0.0
    %917 = vmatpush1.msra.mxu0 0.0
    %918 = vmatprep.subr.mxu0 0.0
    %919 = vmatpush1.msra.mxu0 0.0
    %920 = vmatprep.subr.mxu0 0.0
    %921 = vmatpush1.msra.mxu0 0.0
    %922 = vmatprep.subr.mxu0 0.0
    %923 = vmatpush1.msra.mxu0 0.0
    %924 = vmatprep.subr.mxu0 0.0
    %925 = vmatpush1.msra.mxu0 0.0
    %926 = vmatprep.subr.mxu0 0.0
    %927 = vmatpush1.msra.mxu0 0.0
    %928 = vmatprep.subr.mxu0 0.0
    %929 = vmatpush1.msra.mxu0 0.0
    %930 = vmatprep.subr.mxu0 0.0
    %931 = vmatpush1.msra.mxu0 0.0
    %932 = vmatprep.subr.mxu0 0.0
    %933 = vmatpush1.msra.mxu0 0.0
    %934 = vmatprep.mubr.f32.mxu0 0.0
    %935 = vmatmul.mubr.f32.gmra.mrb[0].mxu0 %v865
    %v936 = vpop.f32.mrb[0].mxu0
    %v937 = vadd.f32 %v863, %v936
    %v938 = vpop.f32.mrb[0].mxu0
    %939 = vmatprep.mubr.f32.mxu0 0.0
    %940 = vmatmul.mubr.f32.gmra.mrb[0].mxu0 %v868
    %v941 = vpop.f32.mrb[0].mxu0
    %v942 = vadd.f32 %v863, %v941
    %v943 = vpop.f32.mrb[0].mxu0
    %944 = vdwg.mxu0
    %947 = vrot.lane.b32.xlu0 %v488, 32
    %v948 = vpop.permute.xlu0 %947
    %949 = vrot.lane.b32.xlu0 %v493, 32
    %v950 = vpop.permute.xlu0 %949
    %v953 = vsel %vm141, %v937, %v948
    %v954 = vsel %vm141, %v942, %v950
    %vm955 = vcmask 392192
    %956 = vst.msk [vmem:[#allocation7] sm:$0xff] %vm955, %v953
    %957 = vst.msk [vmem:[#allocation7 + $0x8] sm:$0xff] %vm955, %v954
    // Predicated region
    $region26: #{tpu_custom_call.1} parent=1 // pred_check
      _
    $region27: #{tpu_custom_call.1} parent=1 // pred_check_branch
      %959 = sbr.rel (0) target = $region29
    $region28: #{tpu_custom_call.1} parent=1 // pred_region
      %s961 = ssub.s32 256, 256
      %962 = vsyncadd [#allocation4], %s961
      %s963 = sshll.u32 [#allocation7], 4
      %s964 = int_to_ptr.vmem [resolvable:$true] %s963
      %969 = dma.vmem_to_hbm [thread:$0]  %s964, 256, %s4, [#allocation4], 128, 128, 8
    $region29: #{tpu_custom_call.1} parent=1 // pred_fallthru
      _
    // Predicated region
    $region30: #{tpu_custom_call.1} parent=1 // pred_check
      _
    $region31: #{tpu_custom_call.1} parent=1 // pred_check_branch
      %971 = sbr.rel (0) target = $region33
    $region32: #{tpu_custom_call.1} parent=1 // pred_region
      %972 = dma.done [#allocation4], 256
    $region33: #{tpu_custom_call.1} parent=1 // pred_fallthru
      _
    %973 = vsyncpa [#allocation3], 1
    %974 = vsyncpa [#allocation6], 1
    %975 = vsyncpa [#allocation4], 1

</llo_original>
